<compile_context>
chip_gen: v6e
topology: v6e:2x2x1
jax: 0.10.0
libtpu: 0.0.40
codegen_flags: <defaults>
</compile_context>

<pallas_src>
import jax
import jax.numpy as jnp
from jax.experimental import pallas as pl
from jax.experimental.pallas import tpu as pltpu

# ---- config (synthetic, small, consistent with the module) ----
B = 2          # batch
S = 8          # cfg.MODEL.MAX_LIMBS (seq_len)
L = 16         # limb_obs_size  (proprioceptive dim = S*L = 128)
H = 32         # hidden / embed dim
D = 2          # limb_out_dim   (out_dim = S*D = 16)

AUG = 8                       # bias-augmentation rows (1 bias row + 7 zero pad, 8-aligned)
R_IW = 0                      # packed-parameter slab row offsets (all 8-aligned)
R_IB = S * L                  # 128
R_W2 = R_IB + S               # 136
R_W3 = R_W2 + H + AUG         # 176
R_END = R_W3 + H + AUG        # 216


def hnmlp_kernel(acts_ref, params_ref, out_ref):
    # Single grid-less invocation; both slabs fully resident in VMEM (<60 KiB total).
    #   acts_ref   (B, 3, S*L) : row0 = obs, row1 = per-lane inv mask, row2 = inv (padded)
    #   params_ref (B, 216, H) : [iw(128) | ib(8) | hw+hb+pad(40) | ow+ob+pad(40)]
    #   out_ref    (B, S*D)
    f32 = jnp.float32
    # Constant [1, 0, ..., 0] augmentation lanes (hoisted out of the batch loop).
    aug = (jax.lax.broadcasted_iota(jnp.int32, (1, AUG), 1) == 0).astype(f32)

    rows = []
    for b in range(B):  # B = 2: static unroll; the two chains interleave in the VLIW schedule
        x = acts_ref[b, 0:1, :] * acts_ref[b, 1:2, :]          # (1, S*L) masked obs (VPU)
        inv_b = acts_ref[b, 2:3, 0:S]                          # (1, S)

        w1 = params_ref[b, R_IW:R_IW + S * L, :]               # (S*L, H)
        b1 = params_ref[b, R_IB:R_IB + S, :]                   # (S,   H)
        w2a = params_ref[b, R_W2:R_W2 + H + AUG, :]            # (H+8, H)   [hw ; hb ; 0]
        w3a = params_ref[b, R_W3:R_W3 + H + AUG, :]            # (H+8, H)   [ow ; ob ; 0] (cols >= S*D zero)

        # Fused input hypernet layer + 'limb_num' aggregation:
        #   sum_s inv[s] * (obs[s] @ W_in[s] + b_in[s])
        #     = (inv*obs).flat @ W_in.flat  +  inv @ b_in
        # K = 128 main dot (one MXU pass on v5e/v6e/v7x); tiny K=8 bias dot is
        # independent of the critical chain.
        t = jnp.dot(x, w1, preferred_element_type=f32)                      # (1, H)
        t = t + jnp.dot(inv_b, b1, preferred_element_type=f32)
        limb_num = jnp.sum(inv_b, axis=1, keepdims=True)                    # (1, 1)
        # NOTE: limb_num == 0 (all limbs masked) gives inf/nan, same as the reference.
        emb = jnp.maximum(t * pl.reciprocal(limb_num, approx=False), 0.0)   # relu

        # Hidden hypernet layer, bias folded via constant-1 lane (K = H+8 = 40).
        emb_a = jnp.concatenate([emb, aug], axis=1)                         # (1, H+8)
        h = jnp.maximum(jnp.dot(emb_a, w2a, preferred_element_type=f32), 0.0)

        # Output hypernet layer: weights pre-transposed/padded so the dot emits the
        # flattened (1, H) row directly; lanes [S*D:H) are exactly zero by construction.
        h_a = jnp.concatenate([h, aug], axis=1)                             # (1, H+8)
        o = jnp.dot(h_a, w3a, preferred_element_type=f32)                   # (1, H)
        rows.append(o[:, 0:S * D])                                          # (1, S*D)

    # One full-block store (no per-sample masked partial stores / WAW ordering).
    out_ref[...] = jnp.concatenate(rows, axis=0)                            # (B, S*D)


def hnmlp_forward(obs, obs_mask, input_w, input_b, hidden_w, hidden_b,
                  output_w, output_b):
    # Wrapper-side packing is layout plumbing only (in production it is produced
    # directly by the hypernet parameter-generation linears); allow_input_fusion lets
    # XLA fuse these producers into the pallas_call operands.
    f32 = jnp.float32
    obs = obs.astype(f32)                                        # (B, S*L)
    inv = 1.0 - obs_mask.astype(f32)                             # (B, S)
    inv_L = jnp.repeat(inv, L, axis=1)                           # (B, S*L) per-lane mask
    inv_pad = jnp.pad(inv, ((0, 0), (0, S * L - S)))             # (B, S*L)
    acts = jnp.stack([obs, inv_L, inv_pad], axis=1)              # (B, 3, S*L)

    zeros7 = jnp.zeros((B, AUG - 1, H), f32)
    iw_flat = input_w.reshape(B, S * L, H)                       # (B, S*L, H)
    hb_row = hidden_b.reshape(B, 1, H)                           # (B, 1, H)
    ow_t = output_w.transpose(0, 2, 1, 3).reshape(B, H, S * D)   # (B, H, S*D)
    ow_pad = jnp.pad(ow_t, ((0, 0), (0, 0), (0, H - S * D)))     # (B, H, H)
    ob_row = jnp.pad(output_b.reshape(B, 1, S * D),
                     ((0, 0), (0, 0), (0, H - S * D)))           # (B, 1, H)
    params = jnp.concatenate(
        [iw_flat, input_b.astype(f32), hidden_w.astype(f32), hb_row, zeros7,
         ow_pad, ob_row, zeros7], axis=1).astype(f32)            # (B, 216, H)
    assert params.shape == (B, R_END, H)

    flops = 2 * B * (S * L * H + S * H + 2 * (H + AUG) * H)
    bytes_accessed = 4 * (acts.size + params.size + B * S * D)

    # Single grid-less invocation, full-extent blocks (exempt from (8,128)
    # divisibility); everything (<60 KiB) resident in VMEM at once.
    return pl.pallas_call(
        hnmlp_kernel,
        out_shape=jax.ShapeDtypeStruct((B, S * D), jnp.float32),
        compiler_params=pltpu.CompilerParams(
            allow_input_fusion=[True, True]),
        cost_estimate=pl.CostEstimate(
            flops=flops, transcendentals=0, bytes_accessed=bytes_accessed),
    )(acts, params)


def hnmlp_reference(obs, obs_mask, input_w, input_b, hidden_w, hidden_b,
                    output_w, output_b):
    """Pure-JAX mirror of the PyTorch forward (eval mode, 'limb_num' aggregation)."""
    obs3 = obs.reshape(B, S, L)
    inv = 1.0 - obs_mask.astype(jnp.float32)                        # (B, S)
    emb = jnp.einsum('bsl,bslh->bsh', obs3, input_w) + input_b      # (B, S, H)
    emb = emb * inv[:, :, None]
    emb = emb.sum(axis=1) / inv.sum(axis=1, keepdims=True)          # (B, H)
    emb = jax.nn.relu(emb)
    emb = jnp.einsum('bh,bhk->bk', emb, hidden_w) + hidden_b        # (B, H)
    emb = jax.nn.relu(emb)
    out = jnp.einsum('bh,bshd->bsd', emb, output_w) + output_b      # (B, S, D)
    return out.reshape(B, -1)


if __name__ == "__main__":
    key = jax.random.PRNGKey(0)
    ks = jax.random.split(key, 8)

    obs = jax.random.normal(ks[0], (B, S * L), dtype=jnp.float32)
    # mask: last limbs padded (sample 0: 2 padded, sample 1: 3 padded)
    obs_mask = jnp.array(
        [[0, 0, 0, 0, 0, 0, 1, 1],
         [0, 0, 0, 0, 0, 1, 1, 1]], dtype=jnp.float32)

    scale = 0.1
    input_w = scale * jax.random.normal(ks[1], (B, S, L, H), dtype=jnp.float32)
    input_b = scale * jax.random.normal(ks[2], (B, S, H), dtype=jnp.float32)
    hidden_w = scale * jax.random.normal(ks[3], (B, H, H), dtype=jnp.float32)
    hidden_b = scale * jax.random.normal(ks[4], (B, H), dtype=jnp.float32)
    output_w = scale * jax.random.normal(ks[5], (B, S, H, D), dtype=jnp.float32)
    output_b = scale * jax.random.normal(ks[6], (B, S, D), dtype=jnp.float32)

    out = hnmlp_forward(obs, obs_mask, input_w, input_b, hidden_w, hidden_b,
                        output_w, output_b)
    out = jax.block_until_ready(out)

    ref = hnmlp_reference(obs, obs_mask, input_w, input_b, hidden_w, hidden_b,
                          output_w, output_b)

    assert out.shape == (B, S * D), out.shape
    assert jnp.allclose(out, ref, atol=1e-5, rtol=1e-5), \
        f"max err {jnp.max(jnp.abs(out - ref))}"
    print("KERNEL_OK")
</pallas_src>

<mosaic_0001>
module attributes {stable_mosaic.version = 11 : i64} {
  func.func @hnmlp_kernel(%arg0: memref<2x3x128xf32, #tpu.memory_space<vmem>>, %arg1: memref<2x216x32xf32, #tpu.memory_space<vmem>>, %arg2: memref<2x16xf32, #tpu.memory_space<vmem>>) attributes {dimension_semantics = [], scalar_prefetch = 0 : i64, scratch_operands = 0 : i64, tpu.core_type = #tpu.core_type<tc>} {
    %0 = tpu.iota {dimensions = array<i32: 1>} : vector<1x8xi32>
    %c0_i32 = arith.constant 0 : i32
    %1 = vector.broadcast %c0_i32 : i32 to vector<1x8xi32>
    %2 = arith.cmpi eq, %0, %1 : vector<1x8xi32>
    %3 = arith.extui %2 : vector<1x8xi1> to vector<1x8xi32>
    %4 = arith.sitofp %3 : vector<1x8xi32> to vector<1x8xf32>
    %c0 = arith.constant 0 : index
    %c0_0 = arith.constant 0 : index
    %c0_1 = arith.constant 0 : index
    %5 = vector.load %arg0[%c0, %c0_0, %c0_1] : memref<2x3x128xf32, #tpu.memory_space<vmem>>, vector<1x1x128xf32>
    %6 = vector.shape_cast %5 : vector<1x1x128xf32> to vector<1x128xf32>
    %c0_2 = arith.constant 0 : index
    %c1 = arith.constant 1 : index
    %c0_3 = arith.constant 0 : index
    %7 = vector.load %arg0[%c0_2, %c1, %c0_3] : memref<2x3x128xf32, #tpu.memory_space<vmem>>, vector<1x1x128xf32>
    %8 = vector.shape_cast %7 : vector<1x1x128xf32> to vector<1x128xf32>
    %9 = arith.mulf %6, %8 : vector<1x128xf32>
    %c0_4 = arith.constant 0 : index
    %c2 = arith.constant 2 : index
    %c0_5 = arith.constant 0 : index
    %10 = vector.load %arg0[%c0_4, %c2, %c0_5] : memref<2x3x128xf32, #tpu.memory_space<vmem>>, vector<1x1x8xf32>
    %11 = vector.shape_cast %10 : vector<1x1x8xf32> to vector<1x8xf32>
    %c0_6 = arith.constant 0 : index
    %c0_7 = arith.constant 0 : index
    %c0_8 = arith.constant 0 : index
    %12 = vector.load %arg1[%c0_6, %c0_7, %c0_8] : memref<2x216x32xf32, #tpu.memory_space<vmem>>, vector<1x128x32xf32>
    %13 = vector.shape_cast %12 : vector<1x128x32xf32> to vector<128x32xf32>
    %c0_9 = arith.constant 0 : index
    %c128 = arith.constant 128 : index
    %c0_10 = arith.constant 0 : index
    %14 = vector.load %arg1[%c0_9, %c128, %c0_10] : memref<2x216x32xf32, #tpu.memory_space<vmem>>, vector<1x8x32xf32>
    %15 = vector.shape_cast %14 : vector<1x8x32xf32> to vector<8x32xf32>
    %c0_11 = arith.constant 0 : index
    %c136 = arith.constant 136 : index
    %c0_12 = arith.constant 0 : index
    %16 = vector.load %arg1[%c0_11, %c136, %c0_12] : memref<2x216x32xf32, #tpu.memory_space<vmem>>, vector<1x40x32xf32>
    %17 = vector.shape_cast %16 : vector<1x40x32xf32> to vector<40x32xf32>
    %c0_13 = arith.constant 0 : index
    %c176 = arith.constant 176 : index
    %c0_14 = arith.constant 0 : index
    %18 = vector.load %arg1[%c0_13, %c176, %c0_14] : memref<2x216x32xf32, #tpu.memory_space<vmem>>, vector<1x40x32xf32>
    %19 = vector.shape_cast %18 : vector<1x40x32xf32> to vector<40x32xf32>
    %cst = arith.constant dense<0.000000e+00> : vector<1x32xf32>
    %20 = tpu.matmul %9, %13, %cst {dimension_numbers = #tpu.dot_dimension_numbers<[1], [0], [0], [1], [0, 0, 1, 1], [], []>} : vector<1x128xf32>, vector<128x32xf32>, vector<1x32xf32> -> vector<1x32xf32>
    %cst_15 = arith.constant dense<0.000000e+00> : vector<1x32xf32>
    %21 = tpu.matmul %11, %15, %cst_15 {dimension_numbers = #tpu.dot_dimension_numbers<[1], [0], [0], [1], [0, 0, 1, 1], [], []>} : vector<1x8xf32>, vector<8x32xf32>, vector<1x32xf32> -> vector<1x32xf32>
    %22 = arith.addf %20, %21 : vector<1x32xf32>
    %cst_16 = arith.constant dense<0.000000e+00> : vector<1xf32>
    %23 = vector.multi_reduction <add>, %11, %cst_16 [1] : vector<1x8xf32> to vector<1xf32>
    %24 = vector.shape_cast %23 : vector<1xf32> to vector<1x1xf32>
    %25 = tpu.reciprocal %24 : vector<1x1xf32> -> vector<1x1xf32>
    %26 = vector.broadcast %25 : vector<1x1xf32> to vector<1x32xf32>
    %27 = arith.mulf %22, %26 : vector<1x32xf32>
    %cst_17 = arith.constant 0.000000e+00 : f32
    %28 = vector.broadcast %cst_17 : f32 to vector<1x32xf32>
    %29 = arith.maximumf %27, %28 : vector<1x32xf32>
    %30 = tpu.concatenate %29, %4 in 1 : vector<1x32xf32>, vector<1x8xf32> -> vector<1x40xf32>
    %cst_18 = arith.constant dense<0.000000e+00> : vector<1x32xf32>
    %31 = tpu.matmul %30, %17, %cst_18 {dimension_numbers = #tpu.dot_dimension_numbers<[1], [0], [0], [1], [0, 0, 1, 1], [], []>} : vector<1x40xf32>, vector<40x32xf32>, vector<1x32xf32> -> vector<1x32xf32>
    %cst_19 = arith.constant 0.000000e+00 : f32
    %32 = vector.broadcast %cst_19 : f32 to vector<1x32xf32>
    %33 = arith.maximumf %31, %32 : vector<1x32xf32>
    %34 = tpu.concatenate %33, %4 in 1 : vector<1x32xf32>, vector<1x8xf32> -> vector<1x40xf32>
    %cst_20 = arith.constant dense<0.000000e+00> : vector<1x32xf32>
    %35 = tpu.matmul %34, %19, %cst_20 {dimension_numbers = #tpu.dot_dimension_numbers<[1], [0], [0], [1], [0, 0, 1, 1], [], []>} : vector<1x40xf32>, vector<40x32xf32>, vector<1x32xf32> -> vector<1x32xf32>
    %36 = vector.extract_strided_slice %35 {offsets = [0, 0], sizes = [1, 16], strides = [1, 1]} : vector<1x32xf32> to vector<1x16xf32>
    %c1_21 = arith.constant 1 : index
    %c0_22 = arith.constant 0 : index
    %c0_23 = arith.constant 0 : index
    %37 = vector.load %arg0[%c1_21, %c0_22, %c0_23] : memref<2x3x128xf32, #tpu.memory_space<vmem>>, vector<1x1x128xf32>
    %38 = vector.shape_cast %37 : vector<1x1x128xf32> to vector<1x128xf32>
    %c1_24 = arith.constant 1 : index
    %c1_25 = arith.constant 1 : index
    %c0_26 = arith.constant 0 : index
    %39 = vector.load %arg0[%c1_24, %c1_25, %c0_26] : memref<2x3x128xf32, #tpu.memory_space<vmem>>, vector<1x1x128xf32>
    %40 = vector.shape_cast %39 : vector<1x1x128xf32> to vector<1x128xf32>
    %41 = arith.mulf %38, %40 : vector<1x128xf32>
    %c1_27 = arith.constant 1 : index
    %c2_28 = arith.constant 2 : index
    %c0_29 = arith.constant 0 : index
    %42 = vector.load %arg0[%c1_27, %c2_28, %c0_29] : memref<2x3x128xf32, #tpu.memory_space<vmem>>, vector<1x1x8xf32>
    %43 = vector.shape_cast %42 : vector<1x1x8xf32> to vector<1x8xf32>
    %c1_30 = arith.constant 1 : index
    %c0_31 = arith.constant 0 : index
    %c0_32 = arith.constant 0 : index
    %44 = vector.load %arg1[%c1_30, %c0_31, %c0_32] : memref<2x216x32xf32, #tpu.memory_space<vmem>>, vector<1x128x32xf32>
    %45 = vector.shape_cast %44 : vector<1x128x32xf32> to vector<128x32xf32>
    %c1_33 = arith.constant 1 : index
    %c128_34 = arith.constant 128 : index
    %c0_35 = arith.constant 0 : index
    %46 = vector.load %arg1[%c1_33, %c128_34, %c0_35] : memref<2x216x32xf32, #tpu.memory_space<vmem>>, vector<1x8x32xf32>
    %47 = vector.shape_cast %46 : vector<1x8x32xf32> to vector<8x32xf32>
    %c1_36 = arith.constant 1 : index
    %c136_37 = arith.constant 136 : index
    %c0_38 = arith.constant 0 : index
    %48 = vector.load %arg1[%c1_36, %c136_37, %c0_38] : memref<2x216x32xf32, #tpu.memory_space<vmem>>, vector<1x40x32xf32>
    %49 = vector.shape_cast %48 : vector<1x40x32xf32> to vector<40x32xf32>
    %c1_39 = arith.constant 1 : index
    %c176_40 = arith.constant 176 : index
    %c0_41 = arith.constant 0 : index
    %50 = vector.load %arg1[%c1_39, %c176_40, %c0_41] : memref<2x216x32xf32, #tpu.memory_space<vmem>>, vector<1x40x32xf32>
    %51 = vector.shape_cast %50 : vector<1x40x32xf32> to vector<40x32xf32>
    %cst_42 = arith.constant dense<0.000000e+00> : vector<1x32xf32>
    %52 = tpu.matmul %41, %45, %cst_42 {dimension_numbers = #tpu.dot_dimension_numbers<[1], [0], [0], [1], [0, 0, 1, 1], [], []>} : vector<1x128xf32>, vector<128x32xf32>, vector<1x32xf32> -> vector<1x32xf32>
    %cst_43 = arith.constant dense<0.000000e+00> : vector<1x32xf32>
    %53 = tpu.matmul %43, %47, %cst_43 {dimension_numbers = #tpu.dot_dimension_numbers<[1], [0], [0], [1], [0, 0, 1, 1], [], []>} : vector<1x8xf32>, vector<8x32xf32>, vector<1x32xf32> -> vector<1x32xf32>
    %54 = arith.addf %52, %53 : vector<1x32xf32>
    %cst_44 = arith.constant dense<0.000000e+00> : vector<1xf32>
    %55 = vector.multi_reduction <add>, %43, %cst_44 [1] : vector<1x8xf32> to vector<1xf32>
    %56 = vector.shape_cast %55 : vector<1xf32> to vector<1x1xf32>
    %57 = tpu.reciprocal %56 : vector<1x1xf32> -> vector<1x1xf32>
    %58 = vector.broadcast %57 : vector<1x1xf32> to vector<1x32xf32>
    %59 = arith.mulf %54, %58 : vector<1x32xf32>
    %cst_45 = arith.constant 0.000000e+00 : f32
    %60 = vector.broadcast %cst_45 : f32 to vector<1x32xf32>
    %61 = arith.maximumf %59, %60 : vector<1x32xf32>
    %62 = tpu.concatenate %61, %4 in 1 : vector<1x32xf32>, vector<1x8xf32> -> vector<1x40xf32>
    %cst_46 = arith.constant dense<0.000000e+00> : vector<1x32xf32>
    %63 = tpu.matmul %62, %49, %cst_46 {dimension_numbers = #tpu.dot_dimension_numbers<[1], [0], [0], [1], [0, 0, 1, 1], [], []>} : vector<1x40xf32>, vector<40x32xf32>, vector<1x32xf32> -> vector<1x32xf32>
    %cst_47 = arith.constant 0.000000e+00 : f32
    %64 = vector.broadcast %cst_47 : f32 to vector<1x32xf32>
    %65 = arith.maximumf %63, %64 : vector<1x32xf32>
    %66 = tpu.concatenate %65, %4 in 1 : vector<1x32xf32>, vector<1x8xf32> -> vector<1x40xf32>
    %cst_48 = arith.constant dense<0.000000e+00> : vector<1x32xf32>
    %67 = tpu.matmul %66, %51, %cst_48 {dimension_numbers = #tpu.dot_dimension_numbers<[1], [0], [0], [1], [0, 0, 1, 1], [], []>} : vector<1x40xf32>, vector<40x32xf32>, vector<1x32xf32> -> vector<1x32xf32>
    %68 = vector.extract_strided_slice %67 {offsets = [0, 0], sizes = [1, 16], strides = [1, 1]} : vector<1x32xf32> to vector<1x16xf32>
    %69 = tpu.concatenate %36, %68 in 0 : vector<1x16xf32>, vector<1x16xf32> -> vector<2x16xf32>
    %c0_49 = arith.constant 0 : index
    %c0_50 = arith.constant 0 : index
    %70 = vector.load %arg2[%c0_49, %c0_50] : memref<2x16xf32, #tpu.memory_space<vmem>>, vector<2x16xf32>
    tpu.vector_store %arg2[%c0_49, %c0_50], %69 {strides = array<i32>} : memref<2x16xf32, #tpu.memory_space<vmem>>, vector<2x16xf32>,
    return
  }
}

</mosaic_0001>

<llo_original>
// kernel: tpu_custom_call.1
$region0: #{tpu_custom_call.1}
  #allocation0 [shape = 'u32[]', space=smem, size = 0x4, offset = 0x4, fixed_abs, tag = 'smem constant byte address 0x4 - core index']
  #allocation1 [shape = 'u32[144,128]{1,0:T(1,128)}', space=vmem, size = 0x12000, scoped, tag = 'internal scratch']
  %s0 = inlined_call_operand.vmem [shape: f32[2,3,128], index: 0, kind: input, shape index: {}]
  %s1 = inlined_call_operand.vmem [shape: f32[2,216,32], index: 1, kind: input, shape index: {}]
  %s2 = inlined_call_operand.hbm [shape: f32[2,16], index: 2, kind: output, shape index: {}]
  %s3 = sld [smem:[#allocation0]]
  $region18: #{tpu_custom_call.1} parent=0
    _
  %s5 = ssub.s32 1, %s3
  %s6 = scalar_select 0, %s5, %s3
  $region1: #{tpu_custom_call.1} parent=0
    #allocation2 [shape = 'u8[1024]{0}', space=vmem, size = 0x400, scoped, tag = 'output window, operand 0, single buffered']
    #allocation3 [shape = 's32[1]{0}', space=sflag, size = 0x4, scoped, tag = 'scoped memory for tpu_custom_call.1']
    %7 = vsyncpa [#allocation3], 0
    // Predicated region
    $region2: #{tpu_custom_call.1} parent=1 // pred_check
      _
    $region3: #{tpu_custom_call.1} parent=1 // pred_check_branch
      %9 = sbr.rel (0) target = $region5
    $region4: #{tpu_custom_call.1} parent=1 // pred_region
      _
    $region5: #{tpu_custom_call.1} parent=1 // pred_fallthru
      _
    // Predicated region
    $region6: #{tpu_custom_call.1} parent=1 // pred_check
      _
    $region7: #{tpu_custom_call.1} parent=1 // pred_check_branch
      %11 = sbr.rel (0) target = $region9
    $region8: #{tpu_custom_call.1} parent=1 // pred_region
      _
    $region9: #{tpu_custom_call.1} parent=1 // pred_fallthru
      _
    %v12 = vlaneseq
    %v13 = vand.u32 %v12, 127
    %vm14 = vcmp.eq.s32.totalorder %v13, 0
    %v15 = vsel %vm14, 1, 0
    %v16 = vcvt.s32.f32 %v15
    %v17 = vld [vmem:[%s0] sm:$0x1]
    %v18 = vld [vmem:[%s0 + $0x1] sm:$0x1]
    %v19 = vmul.f32 %v17, %v18
    %v20 = vld [vmem:[%s0 + $0x2] sm:$0x1]
    %v21 = vld [vmem:[%s1] sm:$0xff]
    %v22 = vld [vmem:[%s1 + $0x8] sm:$0xff]
    %v23 = vld [vmem:[%s1 + $0x10] sm:$0xff]
    %v24 = vld [vmem:[%s1 + $0x18] sm:$0xff]
    %v25 = vld [vmem:[%s1 + $0x20] sm:$0xff]
    %v26 = vld [vmem:[%s1 + $0x28] sm:$0xff]
    %v27 = vld [vmem:[%s1 + $0x30] sm:$0xff]
    %v28 = vld [vmem:[%s1 + $0x38] sm:$0xff]
    %v29 = vld [vmem:[%s1 + $0x40] sm:$0xff]
    %v30 = vld [vmem:[%s1 + $0x48] sm:$0xff]
    %v31 = vld [vmem:[%s1 + $0x50] sm:$0xff]
    %v32 = vld [vmem:[%s1 + $0x58] sm:$0xff]
    %v33 = vld [vmem:[%s1 + $0x60] sm:$0xff]
    %v34 = vld [vmem:[%s1 + $0x68] sm:$0xff]
    %v35 = vld [vmem:[%s1 + $0x70] sm:$0xff]
    %v36 = vld [vmem:[%s1 + $0x78] sm:$0xff]
    %v37 = vld [vmem:[%s1 + $0x80] sm:$0xff]
    %v38 = vld [vmem:[%s1 + $0x88] sm:$0xff]
    %v39 = vld [vmem:[%s1 + $0x90] sm:$0xff]
    %v40 = vld [vmem:[%s1 + $0x98] sm:$0xff]
    %v41 = vld [vmem:[%s1 + $0xa0] sm:$0xff]
    %v42 = vld [vmem:[%s1 + $0xa8] sm:$0xff]
    %v43 = vld [vmem:[%s1 + $0xb0] sm:$0xff]
    %v44 = vld [vmem:[%s1 + $0xb8] sm:$0xff]
    %v45 = vld [vmem:[%s1 + $0xc0] sm:$0xff]
    %v46 = vld [vmem:[%s1 + $0xc8] sm:$0xff]
    %v47 = vld [vmem:[%s1 + $0xd0] sm:$0xff]
    %vm48 = vcmask 64512
    %v50 = vsel %vm48, %v20, 0
    %52 = vmatprep.subr.mxu0 0.0
    %53 = vmatpush1.msra.mxu0 0.0
    %54 = vmatprep.subr.mxu0 0.0
    %55 = vmatpush1.msra.mxu0 0.0
    %56 = vmatprep.subr.mxu0 0.0
    %57 = vmatpush1.msra.mxu0 0.0
    %58 = vmatprep.subr.mxu0 0.0
    %59 = vmatpush1.msra.mxu0 0.0
    %60 = vmatprep.subr.mxu0 0.0
    %61 = vmatpush1.msra.mxu0 0.0
    %62 = vmatprep.subr.mxu0 0.0
    %63 = vmatpush1.msra.mxu0 0.0
    %64 = vmatprep.subr.mxu0 0.0
    %65 = vmatpush1.msra.mxu0 0.0
    %66 = vmatprep.subr.mxu0 0.0
    %67 = vmatpush1.msra.mxu0 0.0
    %68 = vmatprep.subr.mxu0 0.0
    %69 = vmatpush1.msra.mxu0 0.0
    %70 = vmatprep.subr.mxu0 0.0
    %71 = vmatpush1.msra.mxu0 0.0
    %72 = vmatprep.subr.mxu0 0.0
    %73 = vmatpush1.msra.mxu0 0.0
    %74 = vmatprep.subr.mxu0 0.0
    %75 = vmatpush1.msra.mxu0 0.0
    %76 = vmatprep.subr.mxu0 0.0
    %77 = vmatpush1.msra.mxu0 0.0
    %78 = vmatprep.subr.mxu0 0.0
    %79 = vmatpush1.msra.mxu0 0.0
    %80 = vmatprep.subr.mxu0 0.0
    %81 = vmatpush1.msra.mxu0 0.0
    %82 = vmatprep.subr.mxu0 0.0
    %83 = vmatpush1.msra.mxu0 %v37
    %84 = vmatprep.subr.mxu0 0.0
    %85 = vmatpush2.msra.mxu0 0.0
    %86 = vmatprep.subr.mxu0 0.0
    %87 = vmatpush2.msra.mxu0 0.0
    %88 = vmatprep.subr.mxu0 0.0
    %89 = vmatpush2.msra.mxu0 0.0
    %90 = vmatprep.subr.mxu0 0.0
    %91 = vmatpush2.msra.mxu0 0.0
    %92 = vmatprep.subr.mxu0 0.0
    %93 = vmatpush2.msra.mxu0 0.0
    %94 = vmatprep.subr.mxu0 0.0
    %95 = vmatpush2.msra.mxu0 0.0
    %96 = vmatprep.subr.mxu0 0.0
    %97 = vmatpush2.msra.mxu0 0.0
    %98 = vmatprep.subr.mxu0 0.0
    %99 = vmatpush2.msra.mxu0 0.0
    %100 = vmatprep.subr.mxu0 0.0
    %101 = vmatpush2.msra.mxu0 0.0
    %102 = vmatprep.subr.mxu0 0.0
    %103 = vmatpush2.msra.mxu0 0.0
    %104 = vmatprep.subr.mxu0 0.0
    %105 = vmatpush2.msra.mxu0 0.0
    %106 = vmatprep.subr.mxu0 0.0
    %107 = vmatpush2.msra.mxu0 0.0
    %108 = vmatprep.subr.mxu0 0.0
    %109 = vmatpush2.msra.mxu0 0.0
    %110 = vmatprep.subr.mxu0 0.0
    %111 = vmatpush2.msra.mxu0 0.0
    %112 = vmatprep.subr.mxu0 0.0
    %113 = vmatpush2.msra.mxu0 0.0
    %114 = vmatprep.subr.mxu0 0.0
    %115 = vmatpush2.msra.mxu0 0.0
    %116 = vmatprep.mubr.f32.mxu0 0.0
    %117 = vmatmul.mubr.f32.gmra.mxu0 %v50
    %v118 = vpop.f32.mrf.mxu0
    %v119 = vadd.f32 0.0, %v118
    %v120 = vpop.f32.mrf.mxu0
    %121 = vdwg.mxu0
    %122 = vmatprep.subr.mxu0 0.0
    %123 = vmatpush1.msra.mxu0 %v36
    %124 = vmatprep.subr.mxu0 0.0
    %125 = vmatpush1.msra.mxu0 %v35
    %126 = vmatprep.subr.mxu0 0.0
    %127 = vmatpush1.msra.mxu0 %v34
    %128 = vmatprep.subr.mxu0 0.0
    %129 = vmatpush1.msra.mxu0 %v33
    %130 = vmatprep.subr.mxu0 0.0
    %131 = vmatpush1.msra.mxu0 %v32
    %132 = vmatprep.subr.mxu0 0.0
    %133 = vmatpush1.msra.mxu0 %v31
    %134 = vmatprep.subr.mxu0 0.0
    %135 = vmatpush1.msra.mxu0 %v30
    %136 = vmatprep.subr.mxu0 0.0
    %137 = vmatpush1.msra.mxu0 %v29
    %138 = vmatprep.subr.mxu0 0.0
    %139 = vmatpush1.msra.mxu0 %v28
    %140 = vmatprep.subr.mxu0 0.0
    %141 = vmatpush1.msra.mxu0 %v27
    %142 = vmatprep.subr.mxu0 0.0
    %143 = vmatpush1.msra.mxu0 %v26
    %144 = vmatprep.subr.mxu0 0.0
    %145 = vmatpush1.msra.mxu0 %v25
    %146 = vmatprep.subr.mxu0 0.0
    %147 = vmatpush1.msra.mxu0 %v24
    %148 = vmatprep.subr.mxu0 0.0
    %149 = vmatpush1.msra.mxu0 %v23
    %150 = vmatprep.subr.mxu0 0.0
    %151 = vmatpush1.msra.mxu0 %v22
    %152 = vmatprep.subr.mxu0 0.0
    %153 = vmatpush1.msra.mxu0 %v21
    %154 = vmatprep.subr.mxu0 0.0
    %155 = vmatpush2.msra.mxu0 0.0
    %156 = vmatprep.subr.mxu0 0.0
    %157 = vmatpush2.msra.mxu0 0.0
    %158 = vmatprep.subr.mxu0 0.0
    %159 = vmatpush2.msra.mxu0 0.0
    %160 = vmatprep.subr.mxu0 0.0
    %161 = vmatpush2.msra.mxu0 0.0
    %162 = vmatprep.subr.mxu0 0.0
    %163 = vmatpush2.msra.mxu0 0.0
    %164 = vmatprep.subr.mxu0 0.0
    %165 = vmatpush2.msra.mxu0 0.0
    %166 = vmatprep.subr.mxu0 0.0
    %167 = vmatpush2.msra.mxu0 0.0
    %168 = vmatprep.subr.mxu0 0.0
    %169 = vmatpush2.msra.mxu0 0.0
    %170 = vmatprep.subr.mxu0 0.0
    %171 = vmatpush2.msra.mxu0 0.0
    %172 = vmatprep.subr.mxu0 0.0
    %173 = vmatpush2.msra.mxu0 0.0
    %174 = vmatprep.subr.mxu0 0.0
    %175 = vmatpush2.msra.mxu0 0.0
    %176 = vmatprep.subr.mxu0 0.0
    %177 = vmatpush2.msra.mxu0 0.0
    %178 = vmatprep.subr.mxu0 0.0
    %179 = vmatpush2.msra.mxu0 0.0
    %180 = vmatprep.subr.mxu0 0.0
    %181 = vmatpush2.msra.mxu0 0.0
    %182 = vmatprep.subr.mxu0 0.0
    %183 = vmatpush2.msra.mxu0 0.0
    %184 = vmatprep.subr.mxu0 0.0
    %185 = vmatpush2.msra.mxu0 0.0
    %186 = vmatprep.mubr.f32.mxu0 0.0
    %187 = vmatmul.mubr.f32.gmra.mxu0 %v19
    %v188 = vpop.f32.mrf.mxu0
    %v189 = vadd.f32 %v119, %v188
    %v190 = vpop.f32.mrf.mxu0
    %191 = vdwg.mxu0
    %vm192 = vcmask 57344
    %v193 = vsel %vm192, %v20, 0.0
    %194 = vadd.xlane.f32.xlu0 %v193
    %v195 = vpop.xlane.xlu0 %194
    %v196 = vrcp.pop %v195
    %v197 = vmul.f32 %v189, %v196
    %v198 = vmax.f32 %v197, 0.0
    %200 = vrot.lane.b32.xlu0 %v16, 32
    %v201 = vpop.permute.xlu0 %200
    %vm203 = vcmask 261120
    %v204 = vsel %vm203, %v198, %v201
    %vm205 = vcmask 326656
    %v207 = vsel %vm205, %v204, 0
    %209 = vmatprep.subr.mxu0 0.0
    %210 = vmatpush1.msra.mxu0 0.0
    %211 = vmatprep.subr.mxu0 0.0
    %212 = vmatpush1.msra.mxu0 0.0
    %213 = vmatprep.subr.mxu0 0.0
    %214 = vmatpush1.msra.mxu0 0.0
    %215 = vmatprep.subr.mxu0 0.0
    %216 = vmatpush1.msra.mxu0 0.0
    %217 = vmatprep.subr.mxu0 0.0
    %218 = vmatpush1.msra.mxu0 0.0
    %219 = vmatprep.subr.mxu0 0.0
    %220 = vmatpush1.msra.mxu0 0.0
    %221 = vmatprep.subr.mxu0 0.0
    %222 = vmatpush1.msra.mxu0 0.0
    %223 = vmatprep.subr.mxu0 0.0
    %224 = vmatpush1.msra.mxu0 0.0
    %225 = vmatprep.subr.mxu0 0.0
    %226 = vmatpush1.msra.mxu0 0.0
    %227 = vmatprep.subr.mxu0 0.0
    %228 = vmatpush1.msra.mxu0 0.0
    %229 = vmatprep.subr.mxu0 0.0
    %230 = vmatpush1.msra.mxu0 0.0
    %231 = vmatprep.subr.mxu0 0.0
    %232 = vmatpush1.msra.mxu0 %v42
    %233 = vmatprep.subr.mxu0 0.0
    %234 = vmatpush1.msra.mxu0 %v41
    %235 = vmatprep.subr.mxu0 0.0
    %236 = vmatpush1.msra.mxu0 %v40
    %237 = vmatprep.subr.mxu0 0.0
    %238 = vmatpush1.msra.mxu0 %v39
    %239 = vmatprep.subr.mxu0 0.0
    %240 = vmatpush1.msra.mxu0 %v38
    %241 = vmatprep.subr.mxu0 0.0
    %242 = vmatpush2.msra.mxu0 0.0
    %243 = vmatprep.subr.mxu0 0.0
    %244 = vmatpush2.msra.mxu0 0.0
    %245 = vmatprep.subr.mxu0 0.0
    %246 = vmatpush2.msra.mxu0 0.0
    %247 = vmatprep.subr.mxu0 0.0
    %248 = vmatpush2.msra.mxu0 0.0
    %249 = vmatprep.subr.mxu0 0.0
    %250 = vmatpush2.msra.mxu0 0.0
    %251 = vmatprep.subr.mxu0 0.0
    %252 = vmatpush2.msra.mxu0 0.0
    %253 = vmatprep.subr.mxu0 0.0
    %254 = vmatpush2.msra.mxu0 0.0
    %255 = vmatprep.subr.mxu0 0.0
    %256 = vmatpush2.msra.mxu0 0.0
    %257 = vmatprep.subr.mxu0 0.0
    %258 = vmatpush2.msra.mxu0 0.0
    %259 = vmatprep.subr.mxu0 0.0
    %260 = vmatpush2.msra.mxu0 0.0
    %261 = vmatprep.subr.mxu0 0.0
    %262 = vmatpush2.msra.mxu0 0.0
    %263 = vmatprep.subr.mxu0 0.0
    %264 = vmatpush2.msra.mxu0 0.0
    %265 = vmatprep.subr.mxu0 0.0
    %266 = vmatpush2.msra.mxu0 0.0
    %267 = vmatprep.subr.mxu0 0.0
    %268 = vmatpush2.msra.mxu0 0.0
    %269 = vmatprep.subr.mxu0 0.0
    %270 = vmatpush2.msra.mxu0 0.0
    %271 = vmatprep.subr.mxu0 0.0
    %272 = vmatpush2.msra.mxu0 0.0
    %273 = vmatprep.mubr.f32.mxu0 0.0
    %274 = vmatmul.mubr.f32.gmra.mxu0 %v207
    %v275 = vpop.f32.mrf.mxu0
    %v276 = vadd.f32 0.0, %v275
    %v277 = vpop.f32.mrf.mxu0
    %278 = vdwg.mxu0
    %v279 = vmax.f32 %v276, 0.0
    %v280 = vsel %vm203, %v279, %v201
    %v282 = vsel %vm205, %v280, 0
    %284 = vmatprep.subr.mxu0 0.0
    %285 = vmatpush1.msra.mxu0 0.0
    %286 = vmatprep.subr.mxu0 0.0
    %287 = vmatpush1.msra.mxu0 0.0
    %288 = vmatprep.subr.mxu0 0.0
    %289 = vmatpush1.msra.mxu0 0.0
    %290 = vmatprep.subr.mxu0 0.0
    %291 = vmatpush1.msra.mxu0 0.0
    %292 = vmatprep.subr.mxu0 0.0
    %293 = vmatpush1.msra.mxu0 0.0
    %294 = vmatprep.subr.mxu0 0.0
    %295 = vmatpush1.msra.mxu0 0.0
    %296 = vmatprep.subr.mxu0 0.0
    %297 = vmatpush1.msra.mxu0 0.0
    %298 = vmatprep.subr.mxu0 0.0
    %299 = vmatpush1.msra.mxu0 0.0
    %300 = vmatprep.subr.mxu0 0.0
    %301 = vmatpush1.msra.mxu0 0.0
    %302 = vmatprep.subr.mxu0 0.0
    %303 = vmatpush1.msra.mxu0 0.0
    %304 = vmatprep.subr.mxu0 0.0
    %305 = vmatpush1.msra.mxu0 0.0
    %306 = vmatprep.subr.mxu0 0.0
    %307 = vmatpush1.msra.mxu0 %v47
    %308 = vmatprep.subr.mxu0 0.0
    %309 = vmatpush1.msra.mxu0 %v46
    %310 = vmatprep.subr.mxu0 0.0
    %311 = vmatpush1.msra.mxu0 %v45
    %312 = vmatprep.subr.mxu0 0.0
    %313 = vmatpush1.msra.mxu0 %v44
    %314 = vmatprep.subr.mxu0 0.0
    %315 = vmatpush1.msra.mxu0 %v43
    %316 = vmatprep.subr.mxu0 0.0
    %317 = vmatpush2.msra.mxu0 0.0
    %318 = vmatprep.subr.mxu0 0.0
    %319 = vmatpush2.msra.mxu0 0.0
    %320 = vmatprep.subr.mxu0 0.0
    %321 = vmatpush2.msra.mxu0 0.0
    %322 = vmatprep.subr.mxu0 0.0
    %323 = vmatpush2.msra.mxu0 0.0
    %324 = vmatprep.subr.mxu0 0.0
    %325 = vmatpush2.msra.mxu0 0.0
    %326 = vmatprep.subr.mxu0 0.0
    %327 = vmatpush2.msra.mxu0 0.0
    %328 = vmatprep.subr.mxu0 0.0
    %329 = vmatpush2.msra.mxu0 0.0
    %330 = vmatprep.subr.mxu0 0.0
    %331 = vmatpush2.msra.mxu0 0.0
    %332 = vmatprep.subr.mxu0 0.0
    %333 = vmatpush2.msra.mxu0 0.0
    %334 = vmatprep.subr.mxu0 0.0
    %335 = vmatpush2.msra.mxu0 0.0
    %336 = vmatprep.subr.mxu0 0.0
    %337 = vmatpush2.msra.mxu0 0.0
    %338 = vmatprep.subr.mxu0 0.0
    %339 = vmatpush2.msra.mxu0 0.0
    %340 = vmatprep.subr.mxu0 0.0
    %341 = vmatpush2.msra.mxu0 0.0
    %342 = vmatprep.subr.mxu0 0.0
    %343 = vmatpush2.msra.mxu0 0.0
    %344 = vmatprep.subr.mxu0 0.0
    %345 = vmatpush2.msra.mxu0 0.0
    %346 = vmatprep.subr.mxu0 0.0
    %347 = vmatpush2.msra.mxu0 0.0
    %348 = vmatprep.mubr.f32.mxu0 0.0
    %349 = vmatmul.mubr.f32.gmra.mxu0 %v282
    %v350 = vpop.f32.mrf.mxu0
    %v351 = vadd.f32 0.0, %v350
    %v352 = vpop.f32.mrf.mxu0
    %353 = vdwg.mxu0
    %s354 = scalar_lea.vmem %s0, 4
    %v355 = vld [vmem:[%s354] sm:$0x1]
    %v356 = vld [vmem:[%s354 + $0x1] sm:$0x1]
    %v357 = vmul.f32 %v355, %v356
    %v358 = vld [vmem:[%s354 + $0x2] sm:$0x1]
    %s359 = scalar_lea.vmem %s1, 216
    %v360 = vld [vmem:[%s359] sm:$0xff]
    %v361 = vld [vmem:[%s359 + $0x8] sm:$0xff]
    %v362 = vld [vmem:[%s359 + $0x10] sm:$0xff]
    %v363 = vld [vmem:[%s359 + $0x18] sm:$0xff]
    %v364 = vld [vmem:[%s359 + $0x20] sm:$0xff]
    %v365 = vld [vmem:[%s359 + $0x28] sm:$0xff]
    %v366 = vld [vmem:[%s359 + $0x30] sm:$0xff]
    %v367 = vld [vmem:[%s359 + $0x38] sm:$0xff]
    %v368 = vld [vmem:[%s359 + $0x40] sm:$0xff]
    %v369 = vld [vmem:[%s359 + $0x48] sm:$0xff]
    %v370 = vld [vmem:[%s359 + $0x50] sm:$0xff]
    %v371 = vld [vmem:[%s359 + $0x58] sm:$0xff]
    %v372 = vld [vmem:[%s359 + $0x60] sm:$0xff]
    %v373 = vld [vmem:[%s359 + $0x68] sm:$0xff]
    %v374 = vld [vmem:[%s359 + $0x70] sm:$0xff]
    %v375 = vld [vmem:[%s359 + $0x78] sm:$0xff]
    %v376 = vld [vmem:[%s359 + $0x80] sm:$0xff]
    %v377 = vld [vmem:[%s359 + $0x88] sm:$0xff]
    %v378 = vld [vmem:[%s359 + $0x90] sm:$0xff]
    %v379 = vld [vmem:[%s359 + $0x98] sm:$0xff]
    %v380 = vld [vmem:[%s359 + $0xa0] sm:$0xff]
    %v381 = vld [vmem:[%s359 + $0xa8] sm:$0xff]
    %v382 = vld [vmem:[%s359 + $0xb0] sm:$0xff]
    %v383 = vld [vmem:[%s359 + $0xb8] sm:$0xff]
    %v384 = vld [vmem:[%s359 + $0xc0] sm:$0xff]
    %v385 = vld [vmem:[%s359 + $0xc8] sm:$0xff]
    %v386 = vld [vmem:[%s359 + $0xd0] sm:$0xff]
    %v388 = vsel %vm48, %v358, 0
    %390 = vmatprep.subr.mxu0 0.0
    %391 = vmatpush1.msra.mxu0 0.0
    %392 = vmatprep.subr.mxu0 0.0
    %393 = vmatpush1.msra.mxu0 0.0
    %394 = vmatprep.subr.mxu0 0.0
    %395 = vmatpush1.msra.mxu0 0.0
    %396 = vmatprep.subr.mxu0 0.0
    %397 = vmatpush1.msra.mxu0 0.0
    %398 = vmatprep.subr.mxu0 0.0
    %399 = vmatpush1.msra.mxu0 0.0
    %400 = vmatprep.subr.mxu0 0.0
    %401 = vmatpush1.msra.mxu0 0.0
    %402 = vmatprep.subr.mxu0 0.0
    %403 = vmatpush1.msra.mxu0 0.0
    %404 = vmatprep.subr.mxu0 0.0
    %405 = vmatpush1.msra.mxu0 0.0
    %406 = vmatprep.subr.mxu0 0.0
    %407 = vmatpush1.msra.mxu0 0.0
    %408 = vmatprep.subr.mxu0 0.0
    %409 = vmatpush1.msra.mxu0 0.0
    %410 = vmatprep.subr.mxu0 0.0
    %411 = vmatpush1.msra.mxu0 0.0
    %412 = vmatprep.subr.mxu0 0.0
    %413 = vmatpush1.msra.mxu0 0.0
    %414 = vmatprep.subr.mxu0 0.0
    %415 = vmatpush1.msra.mxu0 0.0
    %416 = vmatprep.subr.mxu0 0.0
    %417 = vmatpush1.msra.mxu0 0.0
    %418 = vmatprep.subr.mxu0 0.0
    %419 = vmatpush1.msra.mxu0 0.0
    %420 = vmatprep.subr.mxu0 0.0
    %421 = vmatpush1.msra.mxu0 %v376
    %422 = vmatprep.subr.mxu0 0.0
    %423 = vmatpush2.msra.mxu0 0.0
    %424 = vmatprep.subr.mxu0 0.0
    %425 = vmatpush2.msra.mxu0 0.0
    %426 = vmatprep.subr.mxu0 0.0
    %427 = vmatpush2.msra.mxu0 0.0
    %428 = vmatprep.subr.mxu0 0.0
    %429 = vmatpush2.msra.mxu0 0.0
    %430 = vmatprep.subr.mxu0 0.0
    %431 = vmatpush2.msra.mxu0 0.0
    %432 = vmatprep.subr.mxu0 0.0
    %433 = vmatpush2.msra.mxu0 0.0
    %434 = vmatprep.subr.mxu0 0.0
    %435 = vmatpush2.msra.mxu0 0.0
    %436 = vmatprep.subr.mxu0 0.0
    %437 = vmatpush2.msra.mxu0 0.0
    %438 = vmatprep.subr.mxu0 0.0
    %439 = vmatpush2.msra.mxu0 0.0
    %440 = vmatprep.subr.mxu0 0.0
    %441 = vmatpush2.msra.mxu0 0.0
    %442 = vmatprep.subr.mxu0 0.0
    %443 = vmatpush2.msra.mxu0 0.0
    %444 = vmatprep.subr.mxu0 0.0
    %445 = vmatpush2.msra.mxu0 0.0
    %446 = vmatprep.subr.mxu0 0.0
    %447 = vmatpush2.msra.mxu0 0.0
    %448 = vmatprep.subr.mxu0 0.0
    %449 = vmatpush2.msra.mxu0 0.0
    %450 = vmatprep.subr.mxu0 0.0
    %451 = vmatpush2.msra.mxu0 0.0
    %452 = vmatprep.subr.mxu0 0.0
    %453 = vmatpush2.msra.mxu0 0.0
    %454 = vmatprep.mubr.f32.mxu0 0.0
    %455 = vmatmul.mubr.f32.gmra.mxu0 %v388
    %v456 = vpop.f32.mrf.mxu0
    %v457 = vadd.f32 0.0, %v456
    %v458 = vpop.f32.mrf.mxu0
    %459 = vdwg.mxu0
    %460 = vmatprep.subr.mxu0 0.0
    %461 = vmatpush1.msra.mxu0 %v375
    %462 = vmatprep.subr.mxu0 0.0
    %463 = vmatpush1.msra.mxu0 %v374
    %464 = vmatprep.subr.mxu0 0.0
    %465 = vmatpush1.msra.mxu0 %v373
    %466 = vmatprep.subr.mxu0 0.0
    %467 = vmatpush1.msra.mxu0 %v372
    %468 = vmatprep.subr.mxu0 0.0
    %469 = vmatpush1.msra.mxu0 %v371
    %470 = vmatprep.subr.mxu0 0.0
    %471 = vmatpush1.msra.mxu0 %v370
    %472 = vmatprep.subr.mxu0 0.0
    %473 = vmatpush1.msra.mxu0 %v369
    %474 = vmatprep.subr.mxu0 0.0
    %475 = vmatpush1.msra.mxu0 %v368
    %476 = vmatprep.subr.mxu0 0.0
    %477 = vmatpush1.msra.mxu0 %v367
    %478 = vmatprep.subr.mxu0 0.0
    %479 = vmatpush1.msra.mxu0 %v366
    %480 = vmatprep.subr.mxu0 0.0
    %481 = vmatpush1.msra.mxu0 %v365
    %482 = vmatprep.subr.mxu0 0.0
    %483 = vmatpush1.msra.mxu0 %v364
    %484 = vmatprep.subr.mxu0 0.0
    %485 = vmatpush1.msra.mxu0 %v363
    %486 = vmatprep.subr.mxu0 0.0
    %487 = vmatpush1.msra.mxu0 %v362
    %488 = vmatprep.subr.mxu0 0.0
    %489 = vmatpush1.msra.mxu0 %v361
    %490 = vmatprep.subr.mxu0 0.0
    %491 = vmatpush1.msra.mxu0 %v360
    %492 = vmatprep.subr.mxu0 0.0
    %493 = vmatpush2.msra.mxu0 0.0
    %494 = vmatprep.subr.mxu0 0.0
    %495 = vmatpush2.msra.mxu0 0.0
    %496 = vmatprep.subr.mxu0 0.0
    %497 = vmatpush2.msra.mxu0 0.0
    %498 = vmatprep.subr.mxu0 0.0
    %499 = vmatpush2.msra.mxu0 0.0
    %500 = vmatprep.subr.mxu0 0.0
    %501 = vmatpush2.msra.mxu0 0.0
    %502 = vmatprep.subr.mxu0 0.0
    %503 = vmatpush2.msra.mxu0 0.0
    %504 = vmatprep.subr.mxu0 0.0
    %505 = vmatpush2.msra.mxu0 0.0
    %506 = vmatprep.subr.mxu0 0.0
    %507 = vmatpush2.msra.mxu0 0.0
    %508 = vmatprep.subr.mxu0 0.0
    %509 = vmatpush2.msra.mxu0 0.0
    %510 = vmatprep.subr.mxu0 0.0
    %511 = vmatpush2.msra.mxu0 0.0
    %512 = vmatprep.subr.mxu0 0.0
    %513 = vmatpush2.msra.mxu0 0.0
    %514 = vmatprep.subr.mxu0 0.0
    %515 = vmatpush2.msra.mxu0 0.0
    %516 = vmatprep.subr.mxu0 0.0
    %517 = vmatpush2.msra.mxu0 0.0
    %518 = vmatprep.subr.mxu0 0.0
    %519 = vmatpush2.msra.mxu0 0.0
    %520 = vmatprep.subr.mxu0 0.0
    %521 = vmatpush2.msra.mxu0 0.0
    %522 = vmatprep.subr.mxu0 0.0
    %523 = vmatpush2.msra.mxu0 0.0
    %524 = vmatprep.mubr.f32.mxu0 0.0
    %525 = vmatmul.mubr.f32.gmra.mxu0 %v357
    %v526 = vpop.f32.mrf.mxu0
    %v527 = vadd.f32 %v457, %v526
    %v528 = vpop.f32.mrf.mxu0
    %529 = vdwg.mxu0
    %v530 = vsel %vm192, %v358, 0.0
    %531 = vadd.xlane.f32.xlu0 %v530
    %v532 = vpop.xlane.xlu0 %531
    %v533 = vrcp.pop %v532
    %v534 = vmul.f32 %v527, %v533
    %v535 = vmax.f32 %v534, 0.0
    %v536 = vsel %vm203, %v535, %v201
    %v538 = vsel %vm205, %v536, 0
    %540 = vmatprep.subr.mxu0 0.0
    %541 = vmatpush1.msra.mxu0 0.0
    %542 = vmatprep.subr.mxu0 0.0
    %543 = vmatpush1.msra.mxu0 0.0
    %544 = vmatprep.subr.mxu0 0.0
    %545 = vmatpush1.msra.mxu0 0.0
    %546 = vmatprep.subr.mxu0 0.0
    %547 = vmatpush1.msra.mxu0 0.0
    %548 = vmatprep.subr.mxu0 0.0
    %549 = vmatpush1.msra.mxu0 0.0
    %550 = vmatprep.subr.mxu0 0.0
    %551 = vmatpush1.msra.mxu0 0.0
    %552 = vmatprep.subr.mxu0 0.0
    %553 = vmatpush1.msra.mxu0 0.0
    %554 = vmatprep.subr.mxu0 0.0
    %555 = vmatpush1.msra.mxu0 0.0
    %556 = vmatprep.subr.mxu0 0.0
    %557 = vmatpush1.msra.mxu0 0.0
    %558 = vmatprep.subr.mxu0 0.0
    %559 = vmatpush1.msra.mxu0 0.0
    %560 = vmatprep.subr.mxu0 0.0
    %561 = vmatpush1.msra.mxu0 0.0
    %562 = vmatprep.subr.mxu0 0.0
    %563 = vmatpush1.msra.mxu0 %v381
    %564 = vmatprep.subr.mxu0 0.0
    %565 = vmatpush1.msra.mxu0 %v380
    %566 = vmatprep.subr.mxu0 0.0
    %567 = vmatpush1.msra.mxu0 %v379
    %568 = vmatprep.subr.mxu0 0.0
    %569 = vmatpush1.msra.mxu0 %v378
    %570 = vmatprep.subr.mxu0 0.0
    %571 = vmatpush1.msra.mxu0 %v377
    %572 = vmatprep.subr.mxu0 0.0
    %573 = vmatpush2.msra.mxu0 0.0
    %574 = vmatprep.subr.mxu0 0.0
    %575 = vmatpush2.msra.mxu0 0.0
    %576 = vmatprep.subr.mxu0 0.0
    %577 = vmatpush2.msra.mxu0 0.0
    %578 = vmatprep.subr.mxu0 0.0
    %579 = vmatpush2.msra.mxu0 0.0
    %580 = vmatprep.subr.mxu0 0.0
    %581 = vmatpush2.msra.mxu0 0.0
    %582 = vmatprep.subr.mxu0 0.0
    %583 = vmatpush2.msra.mxu0 0.0
    %584 = vmatprep.subr.mxu0 0.0
    %585 = vmatpush2.msra.mxu0 0.0
    %586 = vmatprep.subr.mxu0 0.0
    %587 = vmatpush2.msra.mxu0 0.0
    %588 = vmatprep.subr.mxu0 0.0
    %589 = vmatpush2.msra.mxu0 0.0
    %590 = vmatprep.subr.mxu0 0.0
    %591 = vmatpush2.msra.mxu0 0.0
    %592 = vmatprep.subr.mxu0 0.0
    %593 = vmatpush2.msra.mxu0 0.0
    %594 = vmatprep.subr.mxu0 0.0
    %595 = vmatpush2.msra.mxu0 0.0
    %596 = vmatprep.subr.mxu0 0.0
    %597 = vmatpush2.msra.mxu0 0.0
    %598 = vmatprep.subr.mxu0 0.0
    %599 = vmatpush2.msra.mxu0 0.0
    %600 = vmatprep.subr.mxu0 0.0
    %601 = vmatpush2.msra.mxu0 0.0
    %602 = vmatprep.subr.mxu0 0.0
    %603 = vmatpush2.msra.mxu0 0.0
    %604 = vmatprep.mubr.f32.mxu0 0.0
    %605 = vmatmul.mubr.f32.gmra.mxu0 %v538
    %v606 = vpop.f32.mrf.mxu0
    %v607 = vadd.f32 0.0, %v606
    %v608 = vpop.f32.mrf.mxu0
    %609 = vdwg.mxu0
    %v610 = vmax.f32 %v607, 0.0
    %v611 = vsel %vm203, %v610, %v201
    %v613 = vsel %vm205, %v611, 0
    %615 = vmatprep.subr.mxu0 0.0
    %616 = vmatpush1.msra.mxu0 0.0
    %617 = vmatprep.subr.mxu0 0.0
    %618 = vmatpush1.msra.mxu0 0.0
    %619 = vmatprep.subr.mxu0 0.0
    %620 = vmatpush1.msra.mxu0 0.0
    %621 = vmatprep.subr.mxu0 0.0
    %622 = vmatpush1.msra.mxu0 0.0
    %623 = vmatprep.subr.mxu0 0.0
    %624 = vmatpush1.msra.mxu0 0.0
    %625 = vmatprep.subr.mxu0 0.0
    %626 = vmatpush1.msra.mxu0 0.0
    %627 = vmatprep.subr.mxu0 0.0
    %628 = vmatpush1.msra.mxu0 0.0
    %629 = vmatprep.subr.mxu0 0.0
    %630 = vmatpush1.msra.mxu0 0.0
    %631 = vmatprep.subr.mxu0 0.0
    %632 = vmatpush1.msra.mxu0 0.0
    %633 = vmatprep.subr.mxu0 0.0
    %634 = vmatpush1.msra.mxu0 0.0
    %635 = vmatprep.subr.mxu0 0.0
    %636 = vmatpush1.msra.mxu0 0.0
    %637 = vmatprep.subr.mxu0 0.0
    %638 = vmatpush1.msra.mxu0 %v386
    %639 = vmatprep.subr.mxu0 0.0
    %640 = vmatpush1.msra.mxu0 %v385
    %641 = vmatprep.subr.mxu0 0.0
    %642 = vmatpush1.msra.mxu0 %v384
    %643 = vmatprep.subr.mxu0 0.0
    %644 = vmatpush1.msra.mxu0 %v383
    %645 = vmatprep.subr.mxu0 0.0
    %646 = vmatpush1.msra.mxu0 %v382
    %647 = vmatprep.subr.mxu0 0.0
    %648 = vmatpush2.msra.mxu0 0.0
    %649 = vmatprep.subr.mxu0 0.0
    %650 = vmatpush2.msra.mxu0 0.0
    %651 = vmatprep.subr.mxu0 0.0
    %652 = vmatpush2.msra.mxu0 0.0
    %653 = vmatprep.subr.mxu0 0.0
    %654 = vmatpush2.msra.mxu0 0.0
    %655 = vmatprep.subr.mxu0 0.0
    %656 = vmatpush2.msra.mxu0 0.0
    %657 = vmatprep.subr.mxu0 0.0
    %658 = vmatpush2.msra.mxu0 0.0
    %659 = vmatprep.subr.mxu0 0.0
    %660 = vmatpush2.msra.mxu0 0.0
    %661 = vmatprep.subr.mxu0 0.0
    %662 = vmatpush2.msra.mxu0 0.0
    %663 = vmatprep.subr.mxu0 0.0
    %664 = vmatpush2.msra.mxu0 0.0
    %665 = vmatprep.subr.mxu0 0.0
    %666 = vmatpush2.msra.mxu0 0.0
    %667 = vmatprep.subr.mxu0 0.0
    %668 = vmatpush2.msra.mxu0 0.0
    %669 = vmatprep.subr.mxu0 0.0
    %670 = vmatpush2.msra.mxu0 0.0
    %671 = vmatprep.subr.mxu0 0.0
    %672 = vmatpush2.msra.mxu0 0.0
    %673 = vmatprep.subr.mxu0 0.0
    %674 = vmatpush2.msra.mxu0 0.0
    %675 = vmatprep.subr.mxu0 0.0
    %676 = vmatpush2.msra.mxu0 0.0
    %677 = vmatprep.subr.mxu0 0.0
    %678 = vmatpush2.msra.mxu0 0.0
    %679 = vmatprep.mubr.f32.mxu0 0.0
    %680 = vmatmul.mubr.f32.gmra.mxu0 %v613
    %v681 = vpop.f32.mrf.mxu0
    %v682 = vadd.f32 0.0, %v681
    %v683 = vpop.f32.mrf.mxu0
    %684 = vdwg.mxu0
    %v686 = vrot.slane %v682, 7
    %vm688 = vcmask 1040384
    %v689 = vsel %vm688, %v351, %v686
    %vm690 = vcmask 123904
    %691 = vst.msk [vmem:[#allocation2] sm:$0x3] %vm690, %v689
    // Predicated region
    $region10: #{tpu_custom_call.1} parent=1 // pred_check
      _
    $region11: #{tpu_custom_call.1} parent=1 // pred_check_branch
      %693 = sbr.rel (0) target = $region13
    $region12: #{tpu_custom_call.1} parent=1 // pred_region
      %s695 = ssub.s32 32, 32
      %696 = vsyncadd [#allocation3], %s695
      %s698 = sshll.u32 [#allocation2], 4
      %s699 = int_to_ptr.vmem [resolvable:$true] %s698
      %701 = dma.vmem_to_hbm [thread:$0]  %s699, 32, %s2, [#allocation3]
    $region13: #{tpu_custom_call.1} parent=1 // pred_fallthru
      _
    // Predicated region
    $region14: #{tpu_custom_call.1} parent=1 // pred_check
      _
    $region15: #{tpu_custom_call.1} parent=1 // pred_check_branch
      %703 = sbr.rel (0) target = $region17
    $region16: #{tpu_custom_call.1} parent=1 // pred_region
      %704 = dma.done [#allocation3], 32
    $region17: #{tpu_custom_call.1} parent=1 // pred_fallthru
      _
    %705 = vsyncpa [#allocation3], 1

</llo_original>
